<compile_context>
chip_gen: v6e
topology: v6e:2x2x1
jax: 0.10.0
libtpu: 0.0.40
codegen_flags: <defaults>
</compile_context>

<pallas_src>
import jax
import jax.numpy as jnp
from jax.experimental import pallas as pl
from jax.experimental.pallas import tpu as pltpu
import numpy as np

EPS = 1e-5


def _make_fused_kernel(N, Cin, Cout, H, W, eps, pad):
    """Returns the fused conv3x3 + BN(train) + ReLU kernel body."""
    HW = H * W
    TAPS = [(dy, dx) for dy in range(3) for dx in range(3)]

    def kernel(x_ref, w_ref, b_ref, g_ref, beta_ref, o_ref,
               stage_sc, col_sc, conv_sc, sum_sc, sumsq_sc, scale_sc, shift_sc):
        p = pl.program_id(0)   # 0: conv + stats, 1: BN + ReLU
        n = pl.program_id(1)   # batch element

        # ---------------- phase 0: conv -> VMEM, accumulate BN statistics ----------------
        @pl.when(p == 0)
        def _conv_and_stats():
            @pl.when(n == 0)
            def _init():
                stage_sc[...] = jnp.zeros_like(stage_sc)
                sum_sc[...] = jnp.zeros_like(sum_sc)
                sumsq_sc[...] = jnp.zeros_like(sumsq_sc)

            # Stage the flattened image at lane offset `pad` so every shifted tap view below
            # stays in bounds; out-of-image lanes are masked, so the halo is never used.
            stage_sc[:, pad:pad + HW] = x_ref[0]

            # flat index -> column index (rows handled by pure range tests on idx).
            idx = jax.lax.broadcasted_iota(jnp.int32, (1, HW), 1)
            if W & (W - 1) == 0:
                col = jnp.bitwise_and(idx, W - 1)       # avoid vector integer division
            else:
                col = idx - (idx // W) * W              # TODO(synk): general-W fallback

            # Build the im2col slab (9*Cin, HW) once in VMEM: one lane-shifted, masked view
            # of the image per tap; a single K=9*Cin matmul afterwards.
            for t, (dy, dx) in enumerate(TAPS):
                oy, ox = dy - 1, dx - 1
                s = oy * W + ox
                shifted = stage_sc[:, pad + s:pad + s + HW]            # (Cin, HW)
                valid = (idx >= max(0, -oy) * W) & (idx < min(H, H - oy) * W)
                if ox != 0:
                    valid = valid & (col + ox >= 0) & (col + ox < W)
                col_sc[t * Cin:(t + 1) * Cin, :] = jnp.where(valid, shifted, 0.0)

            # TODO(synk): on v6e/v7x casting col_sc / w to bfloat16 halves MXU + VMEM cost,
            # kept fp32 here to preserve fp32-exact conv semantics vs the PyTorch module.
            acc = jnp.dot(w_ref[...], col_sc[...],
                          preferred_element_type=jnp.float32)          # (Cout, HW)
            acc = acc + b_ref[...]                                     # + (Cout, 1) bias

            conv_sc[n] = acc
            sum_sc[...] += jnp.sum(acc, axis=1, keepdims=True)
            sumsq_sc[...] += jnp.sum(acc * acc, axis=1, keepdims=True)

        # ---------------- phase 1: finalize stats once, apply BN + ReLU ----------------
        @pl.when(p == 1)
        def _bn_relu():
            @pl.when(n == 0)
            def _finalize_stats():
                count = float(N * HW)
                mean = sum_sc[...] / count
                # clamp avoids tiny negative variances from E[y^2] - E[y]^2 cancellation
                var = jnp.maximum(sumsq_sc[...] / count - mean * mean, 0.0)
                scale = g_ref[...] * jax.lax.rsqrt(var + eps)
                scale_sc[...] = scale
                shift_sc[...] = beta_ref[...] - mean * scale

            y = conv_sc[n]                                             # (Cout, HW) from VMEM
            o_ref[0] = jnp.maximum(y * scale_sc[...] + shift_sc[...], 0.0)

    return kernel


def basic_layer_forward(x_nchw, w_hwio, bias, gamma, beta, eps=EPS):
    """Fused Conv3x3(pad=1, stride=1, bias) -> BatchNorm2d(train) -> ReLU.  x: (N,Cin,H,W)."""
    N, Cin, H, W = x_nchw.shape
    Cout = w_hwio.shape[3]
    HW = H * W
    pad = max(128, W + 1)   # staging halo; 128 keeps the interior write lane-aligned

    # Free (metadata-only) reshapes: no transposes, no spatial padding in XLA.
    x_flat = x_nchw.reshape(N, Cin, HW).astype(jnp.float32)
    w2d = jnp.transpose(w_hwio.astype(jnp.float32).reshape(9 * Cin, Cout))   # (Cout, 9*Cin)
    b_col = bias.reshape(Cout, 1).astype(jnp.float32)
    g_col = gamma.reshape(Cout, 1).astype(jnp.float32)
    beta_col = beta.reshape(Cout, 1).astype(jnp.float32)

    kernel = _make_fused_kernel(N, Cin, Cout, H, W, eps, pad)

    # TODO(synk): conv_sc keeps the whole conv activation (N*Cout*H*W*4 B) resident in VMEM;
    # for large activations (esp. v7x's 64 MiB VMEM) switch to a bf16 HBM round-trip /
    # H-tiled variant instead of full residency.
    out_flat = pl.pallas_call(
        kernel,
        out_shape=jax.ShapeDtypeStruct((N, Cout, HW), jnp.float32),
        grid_spec=pltpu.PrefetchScalarGridSpec(
            num_scalar_prefetch=0,
            grid=(2, N),              # (phase, batch); phase 0 = conv+stats, phase 1 = BN+ReLU
            in_specs=[
                # x: stream batch elements in phase 0; park on the last block in phase 1
                # so no redundant re-fetch happens.
                pl.BlockSpec((1, Cin, HW),
                             lambda p, n: ((1 - p) * n + p * (N - 1), 0, 0)),
                pl.BlockSpec((Cout, 9 * Cin), lambda p, n: (0, 0)),
                pl.BlockSpec((Cout, 1), lambda p, n: (0, 0)),
                pl.BlockSpec((Cout, 1), lambda p, n: (0, 0)),
                pl.BlockSpec((Cout, 1), lambda p, n: (0, 0)),
            ],
            # Output block index only advances during phase 1, so each block is written back
            # to HBM exactly once, with lane-dense (256-wide) stores.
            out_specs=pl.BlockSpec((1, Cout, HW), lambda p, n: (p * n, 0, 0)),
            scratch_shapes=[
                pltpu.VMEM((Cin, HW + 2 * pad), jnp.float32),   # staged flat image (+halo)
                pltpu.VMEM((9 * Cin, HW), jnp.float32),         # im2col slab
                pltpu.VMEM((N, Cout, HW), jnp.float32),         # conv output, all batches
                pltpu.VMEM((Cout, 1), jnp.float32),             # per-channel sum
                pltpu.VMEM((Cout, 1), jnp.float32),             # per-channel sum of squares
                pltpu.VMEM((Cout, 1), jnp.float32),             # BN scale
                pltpu.VMEM((Cout, 1), jnp.float32),             # BN shift
            ],
        ),
        # TODO(synk): batch statistics couple all grid steps, so both axes are sequential; a
        # v7x dual-core variant needs a cross-core reduction of sum/sumsq (CMEM + semaphores).
        compiler_params=pltpu.CompilerParams(
            dimension_semantics=("arbitrary", "arbitrary")),
    )(x_flat, w2d, b_col, g_col, beta_col)

    return out_flat.reshape(N, Cout, H, W)


def reference_forward(x_nchw, w_hwio, bias, gamma, beta, eps=EPS):
    """Pure-JAX reference (matches PyTorch training-mode semantics)."""
    w_oihw = jnp.transpose(w_hwio, (3, 2, 0, 1))
    y = jax.lax.conv_general_dilated(
        x_nchw, w_oihw, window_strides=(1, 1), padding=((1, 1), (1, 1)),
        dimension_numbers=("NCHW", "OIHW", "NCHW"))
    y = y + bias[None, :, None, None]
    mean = y.mean(axis=(0, 2, 3))
    var = ((y - mean[None, :, None, None]) ** 2).mean(axis=(0, 2, 3))  # biased variance
    yhat = (y - mean[None, :, None, None]) / jnp.sqrt(var + eps)[None, :, None, None]
    out = yhat * gamma[None, :, None, None] + beta[None, :, None, None]
    return jnp.maximum(out, 0.0)


if __name__ == "__main__":
    # Small shapes consistent with the module: batch=2, in_channels=4, out_channels=8, 16x16.
    N, Cin, Cout, H, W = 2, 4, 8, 16, 16

    key = jax.random.PRNGKey(0)
    kx, kw, kb, kg, kbeta = jax.random.split(key, 5)

    x = jax.random.normal(kx, (N, Cin, H, W), dtype=jnp.float32)
    w_hwio = 0.1 * jax.random.normal(kw, (3, 3, Cin, Cout), dtype=jnp.float32)  # HWIO layout
    bias = 0.1 * jax.random.normal(kb, (Cout,), dtype=jnp.float32)
    gamma = 1.0 + 0.1 * jax.random.normal(kg, (Cout,), dtype=jnp.float32)       # BN weight
    beta = 0.1 * jax.random.normal(kbeta, (Cout,), dtype=jnp.float32)           # BN bias

    out = jax.block_until_ready(jax.jit(basic_layer_forward)(x, w_hwio, bias, gamma, beta))
    ref = jax.block_until_ready(reference_forward(x, w_hwio, bias, gamma, beta))
    np.testing.assert_allclose(np.asarray(out), np.asarray(ref), atol=1e-4, rtol=1e-4)

    print("KERNEL_OK")
</pallas_src>

<mosaic_0001>
module attributes {stable_mosaic.version = 11 : i64} {
  func.func @kernel(%arg0: i32, %arg1: i32, %arg2: memref<1x4x256xf32, #tpu.memory_space<vmem>>, %arg3: memref<8x36xf32, #tpu.memory_space<vmem>>, %arg4: memref<8x1xf32, #tpu.memory_space<vmem>>, %arg5: memref<8x1xf32, #tpu.memory_space<vmem>>, %arg6: memref<8x1xf32, #tpu.memory_space<vmem>>, %arg7: memref<1x8x256xf32, #tpu.memory_space<vmem>>, %arg8: memref<4x512xf32, #tpu.memory_space<vmem>>, %arg9: memref<36x256xf32, #tpu.memory_space<vmem>>, %arg10: memref<2x8x256xf32, #tpu.memory_space<vmem>>, %arg11: memref<8x1xf32, #tpu.memory_space<vmem>>, %arg12: memref<8x1xf32, #tpu.memory_space<vmem>>, %arg13: memref<8x1xf32, #tpu.memory_space<vmem>>, %arg14: memref<8x1xf32, #tpu.memory_space<vmem>>) attributes {dimension_semantics = [#tpu.dimension_semantics<arbitrary>, #tpu.dimension_semantics<arbitrary>], iteration_bounds = array<i64: 2, 2>, scalar_prefetch = 0 : i64, scratch_operands = 7 : i64, tpu.core_type = #tpu.core_type<tc>, window_params = [{transform_indices = @transform_0, window_bounds = array<i64: 1, 4, 256>}, {pipeline_mode = #tpu.pipeline_mode<synchronous>, transform_indices = @transform_1, window_bounds = array<i64: 8, 36>}, {pipeline_mode = #tpu.pipeline_mode<synchronous>, transform_indices = @transform_2, window_bounds = array<i64: 8, 1>}, {pipeline_mode = #tpu.pipeline_mode<synchronous>, transform_indices = @transform_3, window_bounds = array<i64: 8, 1>}, {pipeline_mode = #tpu.pipeline_mode<synchronous>, transform_indices = @transform_4, window_bounds = array<i64: 8, 1>}, {transform_indices = @transform_5, window_bounds = array<i64: 1, 8, 256>}]} {
    %c0_i32 = arith.constant 0 : i32
    %0 = arith.cmpi eq, %arg0, %c0_i32 : i32
    %1 = arith.extui %0 : i1 to i32
    %c0_i32_0 = arith.constant 0 : i32
    %2 = arith.cmpi ne, %1, %c0_i32_0 : i32
    scf.if %2 {
      %c0_i32_2 = arith.constant 0 : i32
      %6 = arith.cmpi eq, %arg1, %c0_i32_2 : i32
      %7 = arith.extui %6 : i1 to i32
      %c0_i32_3 = arith.constant 0 : i32
      %8 = arith.cmpi ne, %7, %c0_i32_3 : i32
      scf.if %8 {
        %cst_92 = arith.constant 0.000000e+00 : f32
        %195 = vector.broadcast %cst_92 : f32 to vector<4x512xf32>
        %c0_93 = arith.constant 0 : index
        %c0_94 = arith.constant 0 : index
        %196 = vector.load %arg8[%c0_93, %c0_94] : memref<4x512xf32, #tpu.memory_space<vmem>>, vector<4x512xf32>
        tpu.vector_store %arg8[%c0_93, %c0_94], %195 {strides = array<i32>} : memref<4x512xf32, #tpu.memory_space<vmem>>, vector<4x512xf32>,
        %cst_95 = arith.constant 0.000000e+00 : f32
        %197 = vector.broadcast %cst_95 : f32 to vector<8x1xf32>
        %c0_96 = arith.constant 0 : index
        %c0_97 = arith.constant 0 : index
        %198 = vector.load %arg11[%c0_96, %c0_97] : memref<8x1xf32, #tpu.memory_space<vmem>>, vector<8x1xf32>
        tpu.vector_store %arg11[%c0_96, %c0_97], %197 {strides = array<i32>} : memref<8x1xf32, #tpu.memory_space<vmem>>, vector<8x1xf32>,
        %cst_98 = arith.constant 0.000000e+00 : f32
        %199 = vector.broadcast %cst_98 : f32 to vector<8x1xf32>
        %c0_99 = arith.constant 0 : index
        %c0_100 = arith.constant 0 : index
        %200 = vector.load %arg12[%c0_99, %c0_100] : memref<8x1xf32, #tpu.memory_space<vmem>>, vector<8x1xf32>
        tpu.vector_store %arg12[%c0_99, %c0_100], %199 {strides = array<i32>} : memref<8x1xf32, #tpu.memory_space<vmem>>, vector<8x1xf32>,
      } else {
      }
      %c0 = arith.constant 0 : index
      %c0_4 = arith.constant 0 : index
      %c0_5 = arith.constant 0 : index
      %9 = vector.load %arg2[%c0, %c0_4, %c0_5] : memref<1x4x256xf32, #tpu.memory_space<vmem>>, vector<1x4x256xf32>
      %10 = vector.shape_cast %9 : vector<1x4x256xf32> to vector<4x256xf32>
      %c0_6 = arith.constant 0 : index
      %c128 = arith.constant 128 : index
      %11 = vector.load %arg8[%c0_6, %c128] : memref<4x512xf32, #tpu.memory_space<vmem>>, vector<4x256xf32>
      tpu.vector_store %arg8[%c0_6, %c128], %10 {strides = array<i32>} : memref<4x512xf32, #tpu.memory_space<vmem>>, vector<4x256xf32>,
      %12 = tpu.iota {dimensions = array<i32: 1>} : vector<1x256xi32>
      %c15_i32 = arith.constant 15 : i32
      %13 = vector.broadcast %c15_i32 : i32 to vector<1x256xi32>
      %14 = arith.andi %12, %13 : vector<1x256xi32>
      %c0_7 = arith.constant 0 : index
      %c111 = arith.constant 111 : index
      %15 = vector.load %arg8[%c0_7, %c111] : memref<4x512xf32, #tpu.memory_space<vmem>>, vector<4x256xf32>
      %c16_i32 = arith.constant 16 : i32
      %16 = vector.broadcast %c16_i32 : i32 to vector<1x256xi32>
      %17 = arith.cmpi sge, %12, %16 : vector<1x256xi32>
      %c256_i32 = arith.constant 256 : i32
      %18 = vector.broadcast %c256_i32 : i32 to vector<1x256xi32>
      %19 = arith.cmpi slt, %12, %18 : vector<1x256xi32>
      %20 = arith.andi %17, %19 : vector<1x256xi1>
      %c-1_i32 = arith.constant -1 : i32
      %21 = vector.broadcast %c-1_i32 : i32 to vector<1x256xi32>
      %22 = arith.addi %14, %21 : vector<1x256xi32>
      %c0_i32_8 = arith.constant 0 : i32
      %23 = vector.broadcast %c0_i32_8 : i32 to vector<1x256xi32>
      %24 = arith.cmpi sge, %22, %23 : vector<1x256xi32>
      %25 = arith.andi %20, %24 : vector<1x256xi1>
      %c-1_i32_9 = arith.constant -1 : i32
      %26 = vector.broadcast %c-1_i32_9 : i32 to vector<1x256xi32>
      %27 = arith.addi %14, %26 : vector<1x256xi32>
      %c16_i32_10 = arith.constant 16 : i32
      %28 = vector.broadcast %c16_i32_10 : i32 to vector<1x256xi32>
      %29 = arith.cmpi slt, %27, %28 : vector<1x256xi32>
      %30 = arith.andi %25, %29 : vector<1x256xi1>
      %cst = arith.constant 0.000000e+00 : f32
      %31 = vector.shape_cast %30 : vector<1x256xi1> to vector<1x256xi1>
      %32 = vector.broadcast %31 : vector<1x256xi1> to vector<4x256xi1>
      %33 = vector.broadcast %cst : f32 to vector<4x256xf32>
      %34 = arith.select %32, %15, %33 : vector<4x256xi1>, vector<4x256xf32>
      %c0_11 = arith.constant 0 : index
      %c0_12 = arith.constant 0 : index
      %35 = vector.load %arg9[%c0_11, %c0_12] : memref<36x256xf32, #tpu.memory_space<vmem>>, vector<4x256xf32>
      tpu.vector_store %arg9[%c0_11, %c0_12], %34 {strides = array<i32>} : memref<36x256xf32, #tpu.memory_space<vmem>>, vector<4x256xf32>,
      %c0_13 = arith.constant 0 : index
      %c112 = arith.constant 112 : index
      %36 = vector.load %arg8[%c0_13, %c112] : memref<4x512xf32, #tpu.memory_space<vmem>>, vector<4x256xf32>
      %c16_i32_14 = arith.constant 16 : i32
      %37 = vector.broadcast %c16_i32_14 : i32 to vector<1x256xi32>
      %38 = arith.cmpi sge, %12, %37 : vector<1x256xi32>
      %c256_i32_15 = arith.constant 256 : i32
      %39 = vector.broadcast %c256_i32_15 : i32 to vector<1x256xi32>
      %40 = arith.cmpi slt, %12, %39 : vector<1x256xi32>
      %41 = arith.andi %38, %40 : vector<1x256xi1>
      %cst_16 = arith.constant 0.000000e+00 : f32
      %42 = vector.shape_cast %41 : vector<1x256xi1> to vector<1x256xi1>
      %43 = vector.broadcast %42 : vector<1x256xi1> to vector<4x256xi1>
      %44 = vector.broadcast %cst_16 : f32 to vector<4x256xf32>
      %45 = arith.select %43, %36, %44 : vector<4x256xi1>, vector<4x256xf32>
      %c4 = arith.constant 4 : index
      %c0_17 = arith.constant 0 : index
      %46 = vector.load %arg9[%c4, %c0_17] : memref<36x256xf32, #tpu.memory_space<vmem>>, vector<4x256xf32>
      tpu.vector_store %arg9[%c4, %c0_17], %45 {strides = array<i32>} : memref<36x256xf32, #tpu.memory_space<vmem>>, vector<4x256xf32>,
      %c0_18 = arith.constant 0 : index
      %c113 = arith.constant 113 : index
      %47 = vector.load %arg8[%c0_18, %c113] : memref<4x512xf32, #tpu.memory_space<vmem>>, vector<4x256xf32>
      %c16_i32_19 = arith.constant 16 : i32
      %48 = vector.broadcast %c16_i32_19 : i32 to vector<1x256xi32>
      %49 = arith.cmpi sge, %12, %48 : vector<1x256xi32>
      %c256_i32_20 = arith.constant 256 : i32
      %50 = vector.broadcast %c256_i32_20 : i32 to vector<1x256xi32>
      %51 = arith.cmpi slt, %12, %50 : vector<1x256xi32>
      %52 = arith.andi %49, %51 : vector<1x256xi1>
      %c1_i32_21 = arith.constant 1 : i32
      %53 = vector.broadcast %c1_i32_21 : i32 to vector<1x256xi32>
      %54 = arith.addi %14, %53 : vector<1x256xi32>
      %c0_i32_22 = arith.constant 0 : i32
      %55 = vector.broadcast %c0_i32_22 : i32 to vector<1x256xi32>
      %56 = arith.cmpi sge, %54, %55 : vector<1x256xi32>
      %57 = arith.andi %52, %56 : vector<1x256xi1>
      %c1_i32_23 = arith.constant 1 : i32
      %58 = vector.broadcast %c1_i32_23 : i32 to vector<1x256xi32>
      %59 = arith.addi %14, %58 : vector<1x256xi32>
      %c16_i32_24 = arith.constant 16 : i32
      %60 = vector.broadcast %c16_i32_24 : i32 to vector<1x256xi32>
      %61 = arith.cmpi slt, %59, %60 : vector<1x256xi32>
      %62 = arith.andi %57, %61 : vector<1x256xi1>
      %cst_25 = arith.constant 0.000000e+00 : f32
      %63 = vector.shape_cast %62 : vector<1x256xi1> to vector<1x256xi1>
      %64 = vector.broadcast %63 : vector<1x256xi1> to vector<4x256xi1>
      %65 = vector.broadcast %cst_25 : f32 to vector<4x256xf32>
      %66 = arith.select %64, %47, %65 : vector<4x256xi1>, vector<4x256xf32>
      %c8 = arith.constant 8 : index
      %c0_26 = arith.constant 0 : index
      %67 = vector.load %arg9[%c8, %c0_26] : memref<36x256xf32, #tpu.memory_space<vmem>>, vector<4x256xf32>
      tpu.vector_store %arg9[%c8, %c0_26], %66 {strides = array<i32>} : memref<36x256xf32, #tpu.memory_space<vmem>>, vector<4x256xf32>,
      %c0_27 = arith.constant 0 : index
      %c127 = arith.constant 127 : index
      %68 = vector.load %arg8[%c0_27, %c127] : memref<4x512xf32, #tpu.memory_space<vmem>>, vector<4x256xf32>
      %c0_i32_28 = arith.constant 0 : i32
      %69 = vector.broadcast %c0_i32_28 : i32 to vector<1x256xi32>
      %70 = arith.cmpi sge, %12, %69 : vector<1x256xi32>
      %c256_i32_29 = arith.constant 256 : i32
      %71 = vector.broadcast %c256_i32_29 : i32 to vector<1x256xi32>
      %72 = arith.cmpi slt, %12, %71 : vector<1x256xi32>
      %73 = arith.andi %70, %72 : vector<1x256xi1>
      %c-1_i32_30 = arith.constant -1 : i32
      %74 = vector.broadcast %c-1_i32_30 : i32 to vector<1x256xi32>
      %75 = arith.addi %14, %74 : vector<1x256xi32>
      %c0_i32_31 = arith.constant 0 : i32
      %76 = vector.broadcast %c0_i32_31 : i32 to vector<1x256xi32>
      %77 = arith.cmpi sge, %75, %76 : vector<1x256xi32>
      %78 = arith.andi %73, %77 : vector<1x256xi1>
      %c-1_i32_32 = arith.constant -1 : i32
      %79 = vector.broadcast %c-1_i32_32 : i32 to vector<1x256xi32>
      %80 = arith.addi %14, %79 : vector<1x256xi32>
      %c16_i32_33 = arith.constant 16 : i32
      %81 = vector.broadcast %c16_i32_33 : i32 to vector<1x256xi32>
      %82 = arith.cmpi slt, %80, %81 : vector<1x256xi32>
      %83 = arith.andi %78, %82 : vector<1x256xi1>
      %cst_34 = arith.constant 0.000000e+00 : f32
      %84 = vector.shape_cast %83 : vector<1x256xi1> to vector<1x256xi1>
      %85 = vector.broadcast %84 : vector<1x256xi1> to vector<4x256xi1>
      %86 = vector.broadcast %cst_34 : f32 to vector<4x256xf32>
      %87 = arith.select %85, %68, %86 : vector<4x256xi1>, vector<4x256xf32>
      %c12 = arith.constant 12 : index
      %c0_35 = arith.constant 0 : index
      %88 = vector.load %arg9[%c12, %c0_35] : memref<36x256xf32, #tpu.memory_space<vmem>>, vector<4x256xf32>
      tpu.vector_store %arg9[%c12, %c0_35], %87 {strides = array<i32>} : memref<36x256xf32, #tpu.memory_space<vmem>>, vector<4x256xf32>,
      %c0_36 = arith.constant 0 : index
      %c128_37 = arith.constant 128 : index
      %89 = vector.load %arg8[%c0_36, %c128_37] : memref<4x512xf32, #tpu.memory_space<vmem>>, vector<4x256xf32>
      %c0_i32_38 = arith.constant 0 : i32
      %90 = vector.broadcast %c0_i32_38 : i32 to vector<1x256xi32>
      %91 = arith.cmpi sge, %12, %90 : vector<1x256xi32>
      %c256_i32_39 = arith.constant 256 : i32
      %92 = vector.broadcast %c256_i32_39 : i32 to vector<1x256xi32>
      %93 = arith.cmpi slt, %12, %92 : vector<1x256xi32>
      %94 = arith.andi %91, %93 : vector<1x256xi1>
      %cst_40 = arith.constant 0.000000e+00 : f32
      %95 = vector.shape_cast %94 : vector<1x256xi1> to vector<1x256xi1>
      %96 = vector.broadcast %95 : vector<1x256xi1> to vector<4x256xi1>
      %97 = vector.broadcast %cst_40 : f32 to vector<4x256xf32>
      %98 = arith.select %96, %89, %97 : vector<4x256xi1>, vector<4x256xf32>
      %c16 = arith.constant 16 : index
      %c0_41 = arith.constant 0 : index
      %99 = vector.load %arg9[%c16, %c0_41] : memref<36x256xf32, #tpu.memory_space<vmem>>, vector<4x256xf32>
      tpu.vector_store %arg9[%c16, %c0_41], %98 {strides = array<i32>} : memref<36x256xf32, #tpu.memory_space<vmem>>, vector<4x256xf32>,
      %c0_42 = arith.constant 0 : index
      %c129 = arith.constant 129 : index
      %100 = vector.load %arg8[%c0_42, %c129] : memref<4x512xf32, #tpu.memory_space<vmem>>, vector<4x256xf32>
      %c0_i32_43 = arith.constant 0 : i32
      %101 = vector.broadcast %c0_i32_43 : i32 to vector<1x256xi32>
      %102 = arith.cmpi sge, %12, %101 : vector<1x256xi32>
      %c256_i32_44 = arith.constant 256 : i32
      %103 = vector.broadcast %c256_i32_44 : i32 to vector<1x256xi32>
      %104 = arith.cmpi slt, %12, %103 : vector<1x256xi32>
      %105 = arith.andi %102, %104 : vector<1x256xi1>
      %c1_i32_45 = arith.constant 1 : i32
      %106 = vector.broadcast %c1_i32_45 : i32 to vector<1x256xi32>
      %107 = arith.addi %14, %106 : vector<1x256xi32>
      %c0_i32_46 = arith.constant 0 : i32
      %108 = vector.broadcast %c0_i32_46 : i32 to vector<1x256xi32>
      %109 = arith.cmpi sge, %107, %108 : vector<1x256xi32>
      %110 = arith.andi %105, %109 : vector<1x256xi1>
      %c1_i32_47 = arith.constant 1 : i32
      %111 = vector.broadcast %c1_i32_47 : i32 to vector<1x256xi32>
      %112 = arith.addi %14, %111 : vector<1x256xi32>
      %c16_i32_48 = arith.constant 16 : i32
      %113 = vector.broadcast %c16_i32_48 : i32 to vector<1x256xi32>
      %114 = arith.cmpi slt, %112, %113 : vector<1x256xi32>
      %115 = arith.andi %110, %114 : vector<1x256xi1>
      %cst_49 = arith.constant 0.000000e+00 : f32
      %116 = vector.shape_cast %115 : vector<1x256xi1> to vector<1x256xi1>
      %117 = vector.broadcast %116 : vector<1x256xi1> to vector<4x256xi1>
      %118 = vector.broadcast %cst_49 : f32 to vector<4x256xf32>
      %119 = arith.select %117, %100, %118 : vector<4x256xi1>, vector<4x256xf32>
      %c20 = arith.constant 20 : index
      %c0_50 = arith.constant 0 : index
      %120 = vector.load %arg9[%c20, %c0_50] : memref<36x256xf32, #tpu.memory_space<vmem>>, vector<4x256xf32>
      tpu.vector_store %arg9[%c20, %c0_50], %119 {strides = array<i32>} : memref<36x256xf32, #tpu.memory_space<vmem>>, vector<4x256xf32>,
      %c0_51 = arith.constant 0 : index
      %c143 = arith.constant 143 : index
      %121 = vector.load %arg8[%c0_51, %c143] : memref<4x512xf32, #tpu.memory_space<vmem>>, vector<4x256xf32>
      %c0_i32_52 = arith.constant 0 : i32
      %122 = vector.broadcast %c0_i32_52 : i32 to vector<1x256xi32>
      %123 = arith.cmpi sge, %12, %122 : vector<1x256xi32>
      %c240_i32 = arith.constant 240 : i32
      %124 = vector.broadcast %c240_i32 : i32 to vector<1x256xi32>
      %125 = arith.cmpi slt, %12, %124 : vector<1x256xi32>
      %126 = arith.andi %123, %125 : vector<1x256xi1>
      %c-1_i32_53 = arith.constant -1 : i32
      %127 = vector.broadcast %c-1_i32_53 : i32 to vector<1x256xi32>
      %128 = arith.addi %14, %127 : vector<1x256xi32>
      %c0_i32_54 = arith.constant 0 : i32
      %129 = vector.broadcast %c0_i32_54 : i32 to vector<1x256xi32>
      %130 = arith.cmpi sge, %128, %129 : vector<1x256xi32>
      %131 = arith.andi %126, %130 : vector<1x256xi1>
      %c-1_i32_55 = arith.constant -1 : i32
      %132 = vector.broadcast %c-1_i32_55 : i32 to vector<1x256xi32>
      %133 = arith.addi %14, %132 : vector<1x256xi32>
      %c16_i32_56 = arith.constant 16 : i32
      %134 = vector.broadcast %c16_i32_56 : i32 to vector<1x256xi32>
      %135 = arith.cmpi slt, %133, %134 : vector<1x256xi32>
      %136 = arith.andi %131, %135 : vector<1x256xi1>
      %cst_57 = arith.constant 0.000000e+00 : f32
      %137 = vector.shape_cast %136 : vector<1x256xi1> to vector<1x256xi1>
      %138 = vector.broadcast %137 : vector<1x256xi1> to vector<4x256xi1>
      %139 = vector.broadcast %cst_57 : f32 to vector<4x256xf32>
      %140 = arith.select %138, %121, %139 : vector<4x256xi1>, vector<4x256xf32>
      %c24 = arith.constant 24 : index
      %c0_58 = arith.constant 0 : index
      %141 = vector.load %arg9[%c24, %c0_58] : memref<36x256xf32, #tpu.memory_space<vmem>>, vector<4x256xf32>
      tpu.vector_store %arg9[%c24, %c0_58], %140 {strides = array<i32>} : memref<36x256xf32, #tpu.memory_space<vmem>>, vector<4x256xf32>,
      %c0_59 = arith.constant 0 : index
      %c144 = arith.constant 144 : index
      %142 = vector.load %arg8[%c0_59, %c144] : memref<4x512xf32, #tpu.memory_space<vmem>>, vector<4x256xf32>
      %c0_i32_60 = arith.constant 0 : i32
      %143 = vector.broadcast %c0_i32_60 : i32 to vector<1x256xi32>
      %144 = arith.cmpi sge, %12, %143 : vector<1x256xi32>
      %c240_i32_61 = arith.constant 240 : i32
      %145 = vector.broadcast %c240_i32_61 : i32 to vector<1x256xi32>
      %146 = arith.cmpi slt, %12, %145 : vector<1x256xi32>
      %147 = arith.andi %144, %146 : vector<1x256xi1>
      %cst_62 = arith.constant 0.000000e+00 : f32
      %148 = vector.shape_cast %147 : vector<1x256xi1> to vector<1x256xi1>
      %149 = vector.broadcast %148 : vector<1x256xi1> to vector<4x256xi1>
      %150 = vector.broadcast %cst_62 : f32 to vector<4x256xf32>
      %151 = arith.select %149, %142, %150 : vector<4x256xi1>, vector<4x256xf32>
      %c28 = arith.constant 28 : index
      %c0_63 = arith.constant 0 : index
      %152 = vector.load %arg9[%c28, %c0_63] : memref<36x256xf32, #tpu.memory_space<vmem>>, vector<4x256xf32>
      tpu.vector_store %arg9[%c28, %c0_63], %151 {strides = array<i32>} : memref<36x256xf32, #tpu.memory_space<vmem>>, vector<4x256xf32>,
      %c0_64 = arith.constant 0 : index
      %c145 = arith.constant 145 : index
      %153 = vector.load %arg8[%c0_64, %c145] : memref<4x512xf32, #tpu.memory_space<vmem>>, vector<4x256xf32>
      %c0_i32_65 = arith.constant 0 : i32
      %154 = vector.broadcast %c0_i32_65 : i32 to vector<1x256xi32>
      %155 = arith.cmpi sge, %12, %154 : vector<1x256xi32>
      %c240_i32_66 = arith.constant 240 : i32
      %156 = vector.broadcast %c240_i32_66 : i32 to vector<1x256xi32>
      %157 = arith.cmpi slt, %12, %156 : vector<1x256xi32>
      %158 = arith.andi %155, %157 : vector<1x256xi1>
      %c1_i32_67 = arith.constant 1 : i32
      %159 = vector.broadcast %c1_i32_67 : i32 to vector<1x256xi32>
      %160 = arith.addi %14, %159 : vector<1x256xi32>
      %c0_i32_68 = arith.constant 0 : i32
      %161 = vector.broadcast %c0_i32_68 : i32 to vector<1x256xi32>
      %162 = arith.cmpi sge, %160, %161 : vector<1x256xi32>
      %163 = arith.andi %158, %162 : vector<1x256xi1>
      %c1_i32_69 = arith.constant 1 : i32
      %164 = vector.broadcast %c1_i32_69 : i32 to vector<1x256xi32>
      %165 = arith.addi %14, %164 : vector<1x256xi32>
      %c16_i32_70 = arith.constant 16 : i32
      %166 = vector.broadcast %c16_i32_70 : i32 to vector<1x256xi32>
      %167 = arith.cmpi slt, %165, %166 : vector<1x256xi32>
      %168 = arith.andi %163, %167 : vector<1x256xi1>
      %cst_71 = arith.constant 0.000000e+00 : f32
      %169 = vector.shape_cast %168 : vector<1x256xi1> to vector<1x256xi1>
      %170 = vector.broadcast %169 : vector<1x256xi1> to vector<4x256xi1>
      %171 = vector.broadcast %cst_71 : f32 to vector<4x256xf32>
      %172 = arith.select %170, %153, %171 : vector<4x256xi1>, vector<4x256xf32>
      %c32 = arith.constant 32 : index
      %c0_72 = arith.constant 0 : index
      %173 = vector.load %arg9[%c32, %c0_72] : memref<36x256xf32, #tpu.memory_space<vmem>>, vector<4x256xf32>
      tpu.vector_store %arg9[%c32, %c0_72], %172 {strides = array<i32>} : memref<36x256xf32, #tpu.memory_space<vmem>>, vector<4x256xf32>,
      %c0_73 = arith.constant 0 : index
      %c0_74 = arith.constant 0 : index
      %174 = vector.load %arg3[%c0_73, %c0_74] : memref<8x36xf32, #tpu.memory_space<vmem>>, vector<8x36xf32>
      %c0_75 = arith.constant 0 : index
      %c0_76 = arith.constant 0 : index
      %175 = vector.load %arg9[%c0_75, %c0_76] : memref<36x256xf32, #tpu.memory_space<vmem>>, vector<36x256xf32>
      %cst_77 = arith.constant dense<0.000000e+00> : vector<8x256xf32>
      %176 = tpu.matmul %174, %175, %cst_77 {dimension_numbers = #tpu.dot_dimension_numbers<[1], [0], [0], [1], [0, 0, 1, 1], [], []>} : vector<8x36xf32>, vector<36x256xf32>, vector<8x256xf32> -> vector<8x256xf32>
      %c0_78 = arith.constant 0 : index
      %c0_79 = arith.constant 0 : index
      %177 = vector.load %arg4[%c0_78, %c0_79] : memref<8x1xf32, #tpu.memory_space<vmem>>, vector<8x1xf32>
      %178 = vector.broadcast %177 : vector<8x1xf32> to vector<8x256xf32>
      %179 = arith.addf %176, %178 : vector<8x256xf32>
      %180 = arith.index_cast %arg1 : i32 to index
      %c0_80 = arith.constant 0 : index
      %c0_81 = arith.constant 0 : index
      %181 = vector.load %arg10[%180, %c0_80, %c0_81] : memref<2x8x256xf32, #tpu.memory_space<vmem>>, vector<1x8x256xf32>
      %182 = vector.shape_cast %181 : vector<1x8x256xf32> to vector<8x256xf32>
      %183 = vector.shape_cast %179 : vector<8x256xf32> to vector<1x8x256xf32>
      tpu.vector_store %arg10[%180, %c0_80, %c0_81], %183 {strides = array<i32>} : memref<2x8x256xf32, #tpu.memory_space<vmem>>, vector<1x8x256xf32>,
      %c0_82 = arith.constant 0 : index
      %c0_83 = arith.constant 0 : index
      %184 = vector.load %arg11[%c0_82, %c0_83] : memref<8x1xf32, #tpu.memory_space<vmem>>, vector<8x1xf32>
      %cst_84 = arith.constant dense<0.000000e+00> : vector<8xf32>
      %185 = vector.multi_reduction <add>, %179, %cst_84 [1] : vector<8x256xf32> to vector<8xf32>
      %186 = vector.shape_cast %185 : vector<8xf32> to vector<8x1xf32>
      %187 = arith.addf %184, %186 : vector<8x1xf32>
      %c0_85 = arith.constant 0 : index
      %c0_86 = arith.constant 0 : index
      %188 = vector.load %arg11[%c0_85, %c0_86] : memref<8x1xf32, #tpu.memory_space<vmem>>, vector<8x1xf32>
      tpu.vector_store %arg11[%c0_85, %c0_86], %187 {strides = array<i32>} : memref<8x1xf32, #tpu.memory_space<vmem>>, vector<8x1xf32>,
      %c0_87 = arith.constant 0 : index
      %c0_88 = arith.constant 0 : index
      %189 = vector.load %arg12[%c0_87, %c0_88] : memref<8x1xf32, #tpu.memory_space<vmem>>, vector<8x1xf32>
      %190 = arith.mulf %179, %179 : vector<8x256xf32>
      %cst_89 = arith.constant dense<0.000000e+00> : vector<8xf32>
      %191 = vector.multi_reduction <add>, %190, %cst_89 [1] : vector<8x256xf32> to vector<8xf32>
      %192 = vector.shape_cast %191 : vector<8xf32> to vector<8x1xf32>
      %193 = arith.addf %189, %192 : vector<8x1xf32>
      %c0_90 = arith.constant 0 : index
      %c0_91 = arith.constant 0 : index
      %194 = vector.load %arg12[%c0_90, %c0_91] : memref<8x1xf32, #tpu.memory_space<vmem>>, vector<8x1xf32>
      tpu.vector_store %arg12[%c0_90, %c0_91], %193 {strides = array<i32>} : memref<8x1xf32, #tpu.memory_space<vmem>>, vector<8x1xf32>,
    } else {
    }
    %c1_i32 = arith.constant 1 : i32
    %3 = arith.cmpi eq, %arg0, %c1_i32 : i32
    %4 = arith.extui %3 : i1 to i32
    %c0_i32_1 = arith.constant 0 : i32
    %5 = arith.cmpi ne, %4, %c0_i32_1 : i32
    scf.if %5 {
      %c0_i32_2 = arith.constant 0 : i32
      %6 = arith.cmpi eq, %arg1, %c0_i32_2 : i32
      %7 = arith.extui %6 : i1 to i32
      %c0_i32_3 = arith.constant 0 : i32
      %8 = arith.cmpi ne, %7, %c0_i32_3 : i32
      scf.if %8 {
        %c0_12 = arith.constant 0 : index
        %c0_13 = arith.constant 0 : index
        %23 = vector.load %arg11[%c0_12, %c0_13] : memref<8x1xf32, #tpu.memory_space<vmem>>, vector<8x1xf32>
        %cst_14 = arith.constant 5.120000e+02 : f32
        %24 = vector.broadcast %cst_14 : f32 to vector<8x1xf32>
        %25 = arith.divf %23, %24 : vector<8x1xf32>
        %c0_15 = arith.constant 0 : index
        %c0_16 = arith.constant 0 : index
        %26 = vector.load %arg12[%c0_15, %c0_16] : memref<8x1xf32, #tpu.memory_space<vmem>>, vector<8x1xf32>
        %cst_17 = arith.constant 5.120000e+02 : f32
        %27 = vector.broadcast %cst_17 : f32 to vector<8x1xf32>
        %28 = arith.divf %26, %27 : vector<8x1xf32>
        %29 = arith.mulf %25, %25 : vector<8x1xf32>
        %30 = arith.subf %28, %29 : vector<8x1xf32>
        %cst_18 = arith.constant 0.000000e+00 : f32
        %31 = vector.broadcast %cst_18 : f32 to vector<8x1xf32>
        %32 = arith.maximumf %30, %31 : vector<8x1xf32>
        %c0_19 = arith.constant 0 : index
        %c0_20 = arith.constant 0 : index
        %33 = vector.load %arg5[%c0_19, %c0_20] : memref<8x1xf32, #tpu.memory_space<vmem>>, vector<8x1xf32>
        %cst_21 = arith.constant 9.99999974E-6 : f32
        %34 = vector.broadcast %cst_21 : f32 to vector<8x1xf32>
        %35 = arith.addf %32, %34 : vector<8x1xf32>
        %36 = math.rsqrt %35 : vector<8x1xf32>
        %37 = arith.mulf %33, %36 : vector<8x1xf32>
        %c0_22 = arith.constant 0 : index
        %c0_23 = arith.constant 0 : index
        %38 = vector.load %arg13[%c0_22, %c0_23] : memref<8x1xf32, #tpu.memory_space<vmem>>, vector<8x1xf32>
        tpu.vector_store %arg13[%c0_22, %c0_23], %37 {strides = array<i32>} : memref<8x1xf32, #tpu.memory_space<vmem>>, vector<8x1xf32>,
        %c0_24 = arith.constant 0 : index
        %c0_25 = arith.constant 0 : index
        %39 = vector.load %arg6[%c0_24, %c0_25] : memref<8x1xf32, #tpu.memory_space<vmem>>, vector<8x1xf32>
        %40 = arith.mulf %25, %37 : vector<8x1xf32>
        %41 = arith.subf %39, %40 : vector<8x1xf32>
        %c0_26 = arith.constant 0 : index
        %c0_27 = arith.constant 0 : index
        %42 = vector.load %arg14[%c0_26, %c0_27] : memref<8x1xf32, #tpu.memory_space<vmem>>, vector<8x1xf32>
        tpu.vector_store %arg14[%c0_26, %c0_27], %41 {strides = array<i32>} : memref<8x1xf32, #tpu.memory_space<vmem>>, vector<8x1xf32>,
      } else {
      }
      %9 = arith.index_cast %arg1 : i32 to index
      %c0 = arith.constant 0 : index
      %c0_4 = arith.constant 0 : index
      %10 = vector.load %arg10[%9, %c0, %c0_4] : memref<2x8x256xf32, #tpu.memory_space<vmem>>, vector<1x8x256xf32>
      %11 = vector.shape_cast %10 : vector<1x8x256xf32> to vector<8x256xf32>
      %c0_5 = arith.constant 0 : index
      %c0_6 = arith.constant 0 : index
      %12 = vector.load %arg13[%c0_5, %c0_6] : memref<8x1xf32, #tpu.memory_space<vmem>>, vector<8x1xf32>
      %13 = vector.broadcast %12 : vector<8x1xf32> to vector<8x256xf32>
      %14 = arith.mulf %11, %13 : vector<8x256xf32>
      %c0_7 = arith.constant 0 : index
      %c0_8 = arith.constant 0 : index
      %15 = vector.load %arg14[%c0_7, %c0_8] : memref<8x1xf32, #tpu.memory_space<vmem>>, vector<8x1xf32>
      %16 = vector.broadcast %15 : vector<8x1xf32> to vector<8x256xf32>
      %17 = arith.addf %14, %16 : vector<8x256xf32>
      %cst = arith.constant 0.000000e+00 : f32
      %18 = vector.broadcast %cst : f32 to vector<8x256xf32>
      %19 = arith.maximumf %17, %18 : vector<8x256xf32>
      %c0_9 = arith.constant 0 : index
      %c0_10 = arith.constant 0 : index
      %c0_11 = arith.constant 0 : index
      %20 = vector.load %arg7[%c0_9, %c0_10, %c0_11] : memref<1x8x256xf32, #tpu.memory_space<vmem>>, vector<1x8x256xf32>
      %21 = vector.shape_cast %20 : vector<1x8x256xf32> to vector<8x256xf32>
      %22 = vector.shape_cast %19 : vector<8x256xf32> to vector<1x8x256xf32>
      tpu.vector_store %arg7[%c0_9, %c0_10, %c0_11], %22 {strides = array<i32>} : memref<1x8x256xf32, #tpu.memory_space<vmem>>, vector<1x8x256xf32>,
    } else {
    }
    return
  }
  func.func @transform_0(%arg0: i32, %arg1: i32) -> (i32, i32, i32) {
    %c1_i32 = arith.constant 1 : i32
    %0 = arith.subi %c1_i32, %arg0 : i32
    %1 = arith.muli %0, %arg1 : i32
    %c1_i32_0 = arith.constant 1 : i32
    %2 = arith.muli %arg0, %c1_i32_0 : i32
    %3 = arith.addi %1, %2 : i32
    %c0_i32 = arith.constant 0 : i32
    %c0_i32_1 = arith.constant 0 : i32
    %c0_i32_2 = arith.constant 0 : i32
    return %3, %c0_i32, %c0_i32_1 : i32, i32, i32
  }
  func.func @transform_1(%arg0: i32, %arg1: i32) -> (i32, i32) {
    %c0_i32 = arith.constant 0 : i32
    %c0_i32_0 = arith.constant 0 : i32
    %c0_i32_1 = arith.constant 0 : i32
    return %c0_i32, %c0_i32_0 : i32, i32
  }
  func.func @transform_2(%arg0: i32, %arg1: i32) -> (i32, i32) {
    %c0_i32 = arith.constant 0 : i32
    %c0_i32_0 = arith.constant 0 : i32
    %c0_i32_1 = arith.constant 0 : i32
    return %c0_i32, %c0_i32_0 : i32, i32
  }
  func.func @transform_3(%arg0: i32, %arg1: i32) -> (i32, i32) {
    %c0_i32 = arith.constant 0 : i32
    %c0_i32_0 = arith.constant 0 : i32
    %c0_i32_1 = arith.constant 0 : i32
    return %c0_i32, %c0_i32_0 : i32, i32
  }
  func.func @transform_4(%arg0: i32, %arg1: i32) -> (i32, i32) {
    %c0_i32 = arith.constant 0 : i32
    %c0_i32_0 = arith.constant 0 : i32
    %c0_i32_1 = arith.constant 0 : i32
    return %c0_i32, %c0_i32_0 : i32, i32
  }
  func.func @transform_5(%arg0: i32, %arg1: i32) -> (i32, i32, i32) {
    %0 = arith.muli %arg0, %arg1 : i32
    %c0_i32 = arith.constant 0 : i32
    %c0_i32_0 = arith.constant 0 : i32
    %c0_i32_1 = arith.constant 0 : i32
    return %0, %c0_i32, %c0_i32_0 : i32, i32, i32
  }
}

</mosaic_0001>

<llo_original>
// kernel: basic_layer_forward.1
$region0: #{basic_layer_forward.1}
  #allocation0 [shape = 'u32[]', space=smem, size = 0x4, offset = 0x4, fixed_abs, tag = 'smem constant byte address 0x4 - core index']
  #allocation1 [shape = 'u32[144,128]{1,0:T(1,128)}', space=vmem, size = 0x12000, scoped, tag = 'internal scratch']
  #allocation2 [shape = 'f32[4,512]{1,0:T(4,128)}', space=vmem, size = 0x2000, scoped, tag = 'scratch operand']
  #allocation3 [shape = 'f32[36,256]{1,0:T(8,128)}', space=vmem, size = 0xa000, scoped, tag = 'scratch operand']
  #allocation4 [shape = 'f32[2,8,256]{2,1,0:T(8,128)}', space=vmem, size = 0x4000, scoped, tag = 'scratch operand']
  #allocation5 [shape = 'f32[8,1]{1,0:T(8,128)}', space=vmem, size = 0x1000, scoped, tag = 'scratch operand']
  #allocation6 [shape = 'f32[8,1]{1,0:T(8,128)}', space=vmem, size = 0x1000, scoped, tag = 'scratch operand']
  #allocation7 [shape = 'f32[8,1]{1,0:T(8,128)}', space=vmem, size = 0x1000, scoped, tag = 'scratch operand']
  #allocation8 [shape = 'f32[8,1]{1,0:T(8,128)}', space=vmem, size = 0x1000, scoped, tag = 'scratch operand']
  %s0 = inlined_call_operand.vmem [shape: f32[2,4,256], index: 0, kind: input, shape index: {}]
  %s1 = inlined_call_operand.vmem [shape: f32[8,36], index: 1, kind: input, shape index: {}]
  %s2 = inlined_call_operand.vmem [shape: f32[8,1], index: 2, kind: input, shape index: {}]
  %s3 = inlined_call_operand.vmem [shape: f32[8,1], index: 3, kind: input, shape index: {}]
  %s4 = inlined_call_operand.vmem [shape: f32[8,1], index: 4, kind: input, shape index: {}]
  %s5 = inlined_call_operand.vmem [shape: f32[2,8,256], index: 5, kind: output, shape index: {}]
  %s6 = sld [smem:[#allocation0]]
  $region69: #{basic_layer_forward.1} parent=0
    _
  %s8 = ssub.s32 1, %s6
  %s9 = scalar_select 0, %s8, %s6
  loop: start=0, step=1, limit=6
  $region2: #{basic_layer_forward.1} parent=0 // loop_pre_header
    _
  $region3: #{basic_layer_forward.1} parent=0 // loop_header
    %s11 = sphi 0, %s15
    %p12 = scmp.ge.s32.totalorder %s11, 6
    %s18 = sphi 0, %s30
    %s19 = sphi 0, %s26
    %s20 = sphi 0, %s18
    %s21 = sphi 0, %s19
    %s22 = sphi 0, %s20
    %s23 = sphi 0, %s21
    %s39 = sphi 0, %s41
    %s42 = sphi 0, %s39
    %s43 = sphi 0, %s42
    %s59 = sphi 0, %s43
    %s63 = sphi 0, %s63
    %s65 = sphi 0, %s63
    %s66 = sphi 0, %s65
    %s80 = sphi 0, %s66
    %s84 = sphi 0, %s84
    %s86 = sphi 0, %s84
    %s87 = sphi 0, %s86
    %s101 = sphi 0, %s87
    %s105 = sphi 0, %s105
    %s107 = sphi 0, %s105
    %s108 = sphi 0, %s107
    %s122 = sphi 0, %s108
    %s126 = sphi 0, %s126
    %s128 = sphi 0, %s126
    %s129 = sphi 0, %s128
    %s143 = sphi 0, %s129
    %s151 = sphi 0, %s153
    %s154 = sphi 0, %s151
    %s155 = sphi 0, %s154
    %s171 = sphi 0, %s155
  $region4: #{basic_layer_forward.1} parent=0 // loop_header_branch
    %14 = sbr.rel (%p12) target = $region8
  $region5: #{basic_layer_forward.1} parent=0 // loop_body
    %s16 = ssub.s32 %s11, 1
    %s17 = ssub.s32 %s11, 2
    %s24 = sadd.s32 1, %s19
    %p25 = scmp.ge.s32.totalorder %s24, 2
    %s26 = scalar_select %p25, 0, %s24
    %s27 = sadd.s32 1, %s18
    %s28 = scalar_select %p25, %s27, %s18
    %p29 = scmp.ge.s32.totalorder %s28, 2
    %s30 = scalar_select %p29, 0, %s28
    %s31 = ssub.s32 1, %s18
    %s32 = smul.u32 %s31, %s19
    %s33 = sadd.s32 %s32, %s18
    %s34 = ssub.s32 1, %s30
    %s35 = smul.u32 %s34, %s26
    %s36 = sadd.s32 %s35, %s30
    %s37 = ssub.s32 %s33, %s36
    %p38 = scmp.eq.s32.totalorder %s37, 0
    %s40 = sadd.s32 %s39, 1
    %s41 = scalar_select %p38, %s39, %s40
    %p44 = pneg %p38
    %p45 = scmp.eq.s32.totalorder %s11, 3
    %p46 = por %p44, %p45
    %p47 = scmp.ne.s32.totalorder %s39, %s42
    %p48 = scmp.eq.s32.totalorder %s11, 0
    %p49 = por %p47, %p48
    %p50 = scmp.ne.s32.totalorder %s39, %s42
    %p51 = scmp.eq.s32.totalorder %s16, 3
    %p52 = por %p50, %p51
    %p53 = scmp.ne.s32.totalorder %s42, %s43
    %p54 = scmp.eq.s32.totalorder %s16, 0
    %p55 = por %p53, %p54
    %p56 = scmp.ne.s32.totalorder %s42, %s43
    %p57 = scmp.eq.s32.totalorder %s17, 3
    %p58 = por %p56, %p57
    %p60 = scmp.ne.s32.totalorder %s43, %s59
    %p61 = scmp.eq.s32.totalorder %s17, 0
    %p62 = por %p60, %p61
    %s64 = sadd.s32 %s63, 1
    %p67 = scmp.eq.s32.totalorder %s11, 3
    %p68 = scmp.ne.s32.totalorder %s63, %s65
    %p69 = scmp.eq.s32.totalorder %s11, 0
    %p70 = por %p68, %p69
    %p71 = scmp.ne.s32.totalorder %s63, %s65
    %p72 = scmp.eq.s32.totalorder %s16, 3
    %p73 = por %p71, %p72
    %p74 = scmp.ne.s32.totalorder %s65, %s66
    %p75 = scmp.eq.s32.totalorder %s16, 0
    %p76 = por %p74, %p75
    %p77 = scmp.ne.s32.totalorder %s65, %s66
    %p78 = scmp.eq.s32.totalorder %s17, 3
    %p79 = por %p77, %p78
    %p81 = scmp.ne.s32.totalorder %s66, %s80
    %p82 = scmp.eq.s32.totalorder %s17, 0
    %p83 = por %p81, %p82
    %s85 = sadd.s32 %s84, 1
    %p88 = scmp.eq.s32.totalorder %s11, 3
    %p89 = scmp.ne.s32.totalorder %s84, %s86
    %p90 = scmp.eq.s32.totalorder %s11, 0
    %p91 = por %p89, %p90
    %p92 = scmp.ne.s32.totalorder %s84, %s86
    %p93 = scmp.eq.s32.totalorder %s16, 3
    %p94 = por %p92, %p93
    %p95 = scmp.ne.s32.totalorder %s86, %s87
    %p96 = scmp.eq.s32.totalorder %s16, 0
    %p97 = por %p95, %p96
    %p98 = scmp.ne.s32.totalorder %s86, %s87
    %p99 = scmp.eq.s32.totalorder %s17, 3
    %p100 = por %p98, %p99
    %p102 = scmp.ne.s32.totalorder %s87, %s101
    %p103 = scmp.eq.s32.totalorder %s17, 0
    %p104 = por %p102, %p103
    %s106 = sadd.s32 %s105, 1
    %p109 = scmp.eq.s32.totalorder %s11, 3
    %p110 = scmp.ne.s32.totalorder %s105, %s107
    %p111 = scmp.eq.s32.totalorder %s11, 0
    %p112 = por %p110, %p111
    %p113 = scmp.ne.s32.totalorder %s105, %s107
    %p114 = scmp.eq.s32.totalorder %s16, 3
    %p115 = por %p113, %p114
    %p116 = scmp.ne.s32.totalorder %s107, %s108
    %p117 = scmp.eq.s32.totalorder %s16, 0
    %p118 = por %p116, %p117
    %p119 = scmp.ne.s32.totalorder %s107, %s108
    %p120 = scmp.eq.s32.totalorder %s17, 3
    %p121 = por %p119, %p120
    %p123 = scmp.ne.s32.totalorder %s108, %s122
    %p124 = scmp.eq.s32.totalorder %s17, 0
    %p125 = por %p123, %p124
    %s127 = sadd.s32 %s126, 1
    %p130 = scmp.eq.s32.totalorder %s11, 3
    %p131 = scmp.ne.s32.totalorder %s126, %s128
    %p132 = scmp.eq.s32.totalorder %s11, 0
    %p133 = por %p131, %p132
    %p134 = scmp.ne.s32.totalorder %s126, %s128
    %p135 = scmp.eq.s32.totalorder %s16, 3
    %p136 = por %p134, %p135
    %p137 = scmp.ne.s32.totalorder %s128, %s129
    %p138 = scmp.eq.s32.totalorder %s16, 0
    %p139 = por %p137, %p138
    %p140 = scmp.ne.s32.totalorder %s128, %s129
    %p141 = scmp.eq.s32.totalorder %s17, 3
    %p142 = por %p140, %p141
    %p144 = scmp.ne.s32.totalorder %s129, %s143
    %p145 = scmp.eq.s32.totalorder %s17, 0
    %p146 = por %p144, %p145
    %s147 = smul.u32 %s18, %s19
    %s148 = smul.u32 %s30, %s26
    %s149 = ssub.s32 %s147, %s148
    %p150 = scmp.eq.s32.totalorder %s149, 0
    %s152 = sadd.s32 %s151, 1
    %s153 = scalar_select %p150, %s151, %s152
    %p156 = pneg %p150
    %p157 = scmp.eq.s32.totalorder %s11, 3
    %p158 = por %p156, %p157
    %p159 = scmp.ne.s32.totalorder %s151, %s154
    %p160 = scmp.eq.s32.totalorder %s11, 0
    %p161 = por %p159, %p160
    %p162 = scmp.ne.s32.totalorder %s151, %s154
    %p163 = scmp.eq.s32.totalorder %s16, 3
    %p164 = por %p162, %p163
    %p165 = scmp.ne.s32.totalorder %s154, %s155
    %p166 = scmp.eq.s32.totalorder %s16, 0
    %p167 = por %p165, %p166
    %p168 = scmp.ne.s32.totalorder %s154, %s155
    %p169 = scmp.eq.s32.totalorder %s17, 3
    %p170 = por %p168, %p169
    %p172 = scmp.ne.s32.totalorder %s155, %s171
    %p173 = scmp.eq.s32.totalorder %s17, 0
    %p174 = por %p172, %p173
    %p175 = scmp.le.s32.totalorder 1, %s11
    %p176 = scmp.lt.s32.totalorder %s11, 5
    %p177 = pnand %p175, %p176
    %p178 = pneg %p177
    // Predicated region
    $region9: #{basic_layer_forward.1} parent=5 // pred_check
      _
    $region10: #{basic_layer_forward.1} parent=5 // pred_check_branch
      %180 = sbr.rel (%p177) target = $region12
    $region11: #{basic_layer_forward.1} parent=5 // pred_region
      %s181 = ssub.s32 %s11, 1
      // Predicated region
      $region13: #{basic_layer_forward.1} parent=11 // pred_check
        %p182 = pneg %p76
      $region14: #{basic_layer_forward.1} parent=11 // pred_check_branch
        %184 = sbr.rel (%p182) target = $region16
      $region15: #{basic_layer_forward.1} parent=11 // pred_region
        _
      $region16: #{basic_layer_forward.1} parent=11 // pred_fallthru
        _
      // Predicated region
      $region17: #{basic_layer_forward.1} parent=11 // pred_check
        %p185 = pneg %p97
      $region18: #{basic_layer_forward.1} parent=11 // pred_check_branch
        %187 = sbr.rel (%p185) target = $region20
      $region19: #{basic_layer_forward.1} parent=11 // pred_region
        _
      $region20: #{basic_layer_forward.1} parent=11 // pred_fallthru
        _
      // Predicated region
      $region21: #{basic_layer_forward.1} parent=11 // pred_check
        %p188 = pneg %p118
      $region22: #{basic_layer_forward.1} parent=11 // pred_check_branch
        %190 = sbr.rel (%p188) target = $region24
      $region23: #{basic_layer_forward.1} parent=11 // pred_region
        _
      $region24: #{basic_layer_forward.1} parent=11 // pred_fallthru
        _
      // Predicated region
      $region25: #{basic_layer_forward.1} parent=11 // pred_check
        %p191 = pneg %p139
      $region26: #{basic_layer_forward.1} parent=11 // pred_check_branch
        %193 = sbr.rel (%p191) target = $region28
      $region27: #{basic_layer_forward.1} parent=11 // pred_region
        _
      $region28: #{basic_layer_forward.1} parent=11 // pred_fallthru
        _
    $region12: #{basic_layer_forward.1} parent=5 // pred_fallthru
      _
    %p194 = scmp.lt.s32.totalorder %s11, 4
    // Predicated region
    $region29: #{basic_layer_forward.1} parent=5 // pred_check
      %p195 = pneg %p194
    $region30: #{basic_layer_forward.1} parent=5 // pred_check_branch
      %197 = sbr.rel (%p195) target = $region32
    $region31: #{basic_layer_forward.1} parent=5 // pred_region
      // Predicated region
      $region33: #{basic_layer_forward.1} parent=31 // pred_check
        %p198 = pneg %p49
      $region34: #{basic_layer_forward.1} parent=31 // pred_check_branch
        %200 = sbr.rel (%p198) target = $region36
      $region35: #{basic_layer_forward.1} parent=31 // pred_region
        %s201 = ssub.s32 1, %s18
        %s202 = smul.u32 %s201, %s19
        %s203 = sadd.s32 %s202, %s18
        %p204 = scmp.lt.s32.totalorder %s203, 1
        %s205 = scalar_select %p204, %s203, 1
        %s206 = smul.addr %s205, 2
        %s207 = smul.addr %s206, 4
        %s208 = scalar_lea.vmem %s0, %s207
        %s209 = ssub.s32 1, %s18
        %s210 = smul.u32 %s209, %s19
        %s211 = sadd.s32 %s210, %s18
      $region36: #{basic_layer_forward.1} parent=31 // pred_fallthru
        _
    $region32: #{basic_layer_forward.1} parent=5 // pred_fallthru
      _
    %p212 = scmp.le.s32.totalorder 1, %s11
    %p213 = scmp.lt.s32.totalorder %s11, 5
    %p214 = pnand %p212, %p213
    %p215 = pneg %p214
    // Predicated region
    $region37: #{basic_layer_forward.1} parent=5 // pred_check
      _
    $region38: #{basic_layer_forward.1} parent=5 // pred_check_branch
      %217 = sbr.rel (%p214) target = $region40
    $region39: #{basic_layer_forward.1} parent=5 // pred_region
      %s218 = ssub.s32 %s11, 1
      %s219 = ssub.s32 1, %s20
      %s220 = smul.u32 %s219, %s21
      %s221 = sadd.s32 %s220, %s20
      %p222 = scmp.lt.s32.totalorder %s221, 1
      %s223 = scalar_select %p222, %s221, 1
      %s224 = smul.addr %s223, 2
      %s225 = smul.addr %s224, 4
      %s226 = scalar_lea.vmem %s0, %s225
      %p227 = pneg %p55
      %p228 = pneg %p52
      %p229 = pneg %p76
      %p230 = pneg %p73
      %p231 = pneg %p97
      %p232 = pneg %p94
      %p233 = pneg %p118
      %p234 = pneg %p115
      %p235 = pneg %p139
      %p236 = pneg %p136
      %p237 = pneg %p167
      %p238 = pneg %p164
      %s239 = smul.u32 %s20, %s21
      %p240 = scmp.lt.s32.totalorder %s239, 1
      %s241 = scalar_select %p240, %s239, 1
      %s242 = smul.addr %s241, 2
      %s243 = smul.addr %s242, 8
      %s244 = scalar_lea.vmem %s5, %s243
      %s245 = ssub.s32 1, %s20
      %s246 = smul.u32 %s245, %s21
      %s247 = sadd.s32 %s246, %s20
      %p248 = scmp.lt.s32.totalorder %s247, 1
      %s249 = scalar_select %p248, %s247, 1
      %s250 = smul.addr %s249, 2
      %s251 = smul.addr %s250, 4
      %s252 = scalar_lea.vmem %s0, %s251
      %s253 = ssub.s32 1, %s20
      %s254 = smul.u32 %s253, %s21
      %s255 = sadd.s32 %s254, %s20
      %s256 = smul.u32 %s20, %s21
      %p257 = scmp.lt.s32.totalorder %s256, 1
      %s258 = scalar_select %p257, %s256, 1
      %s259 = smul.addr %s258, 2
      %s260 = smul.addr %s259, 8
      %s261 = scalar_lea.vmem %s5, %s260
      %s262 = smul.u32 %s20, %s21
      %p263 = scmp.eq.s32.totalorder %s20, 0
      // Predicated region
      $region41: #{basic_layer_forward.1} parent=39 // pred_check
        %p264 = pneg %p263
      $region42: #{basic_layer_forward.1} parent=39 // pred_check_branch
        %266 = sbr.rel (%p264) target = $region44
      $region43: #{basic_layer_forward.1} parent=39 // pred_region
        %p267 = scmp.eq.s32.totalorder %s21, 0
        // Predicated region
        $region45: #{basic_layer_forward.1} parent=43 // pred_check
          %p268 = pneg %p267
        $region46: #{basic_layer_forward.1} parent=43 // pred_check_branch
          %270 = sbr.rel (%p268) target = $region48
        $region47: #{basic_layer_forward.1} parent=43 // pred_region
          %271 = vst [vmem:[#allocation2] sm:$0xff] 0.0
          %272 = vst [vmem:[#allocation2 + $0x8] sm:$0xff] 0.0
          %vm273 = vcmask 7168
          %274 = vst.msk [vmem:[#allocation5] sm:$0xff] %vm273, 0.0
          %275 = vst.msk [vmem:[#allocation6] sm:$0xff] %vm273, 0.0
        $region48: #{basic_layer_forward.1} parent=43 // pred_fallthru
          _
        %v276 = vld [vmem:[%s252] sm:$0xff]
        %277 = vst [vmem:[#allocation2 + $0x4] sm:$0xff] %v276
        %v278 = vlaneseq
        %v279 = vand.u32 %v278, 127
        %v280 = vadd.s32 %v279, 128
        %v281 = vand.u32 %v279, 15
        %v282 = vand.u32 %v280, 15
        %v283 = vld [vmem:[#allocation2] sm:$0xff]
        %v284 = vld [vmem:[#allocation2 + $0x8] sm:$0xf]
        %vm285 = vcmp.ge.s32.totalorder %v279, 16
        %vm286 = vcmp.ge.s32.totalorder %v280, 16
        %vm287 = vcmp.lt.s32.totalorder %v279, 256
        %vm288 = vcmp.lt.s32.totalorder %v280, 256
        %vm289 = vmand %vm285, %vm287
        %vm290 = vmand %vm286, %vm288
        %v291 = vadd.s32 %v281, 4294967295
        %v292 = vadd.s32 %v282, 4294967295
        %vm293 = vcmp.ge.s32.totalorder %v291, 0
        %vm294 = vcmp.ge.s32.totalorder %v292, 0
        %vm295 = vmand %vm289, %vm293
        %vm296 = vmand %vm290, %vm294
        %vm297 = vcmp.lt.s32.totalorder %v291, 16
        %vm298 = vcmp.lt.s32.totalorder %v292, 16
        %vm299 = vmand %vm295, %vm297
        %vm300 = vmand %vm296, %vm298
        %v301 = vsel %vm299, 1, 0
        %v302 = vsel %vm300, 1, 0
        %vm303 = vcmp.eq.s32.totalorder %v301, 1
        %vm304 = vcmp.eq.s32.totalorder %v302, 1
        %v307 = vcombine.high %v283, %v283
        %308 = vrot.lane.b32.xlu0 %v283, 17
        %v309 = vpop.permute.xlu0 %308
        %310 = vrot.lane.b32.xlu0 %v307, 17
        %v311 = vpop.permute.xlu0 %310
        %312 = vrot.lane.b32.xlu0 %v284, 17
        %v313 = vpop.permute.xlu0 %312
        %vm314 = vcmask 138240
        %v315 = vsel %vm314, %v309, %v311
        %v316 = vsel %vm314, %v311, %v313
        %v319 = vsel %vm303, %v315, 0.0
        %v320 = vsel %vm304, %v316, 0.0
        %321 = vst [vmem:[#allocation3] sm:$0xf] %v319
        %322 = vst [vmem:[#allocation3 + $0x8] sm:$0xf] %v320
        %v323 = vld [vmem:[#allocation2] sm:$0xff]
        %v324 = vld [vmem:[#allocation2 + $0x8] sm:$0xf]
        %v325 = vsel %vm289, 1, 0
        %v326 = vsel %vm290, 1, 0
        %vm327 = vcmp.eq.s32.totalorder %v325, 1
        %vm328 = vcmp.eq.s32.totalorder %v326, 1
        %v331 = vcombine.high %v323, %v323
        %332 = vrot.lane.b32.xlu0 %v323, 16
        %v333 = vpop.permute.xlu0 %332
        %334 = vrot.lane.b32.xlu0 %v331, 16
        %v335 = vpop.permute.xlu0 %334
        %336 = vrot.lane.b32.xlu0 %v324, 16
        %v337 = vpop.permute.xlu0 %336
        %vm338 = vcmask 130048
        %v339 = vsel %vm338, %v333, %v335
        %v340 = vsel %vm338, %v335, %v337
        %v343 = vsel %vm327, %v339, 0.0
        %v344 = vsel %vm328, %v340, 0.0
        %v347 = vrot.slane %v343, 4
        %v348 = vrot.slane %v344, 4
        %351 = vst [vmem:[#allocation3] sm:$0xf0] %v347
        %352 = vst [vmem:[#allocation3 + $0x8] sm:$0xf0] %v348
        %v353 = vld [vmem:[#allocation2] sm:$0xff]
        %v354 = vld [vmem:[#allocation2 + $0x8] sm:$0xf]
        %v355 = vadd.s32 %v281, 1
        %v356 = vadd.s32 %v282, 1
        %vm357 = vcmp.ge.s32.totalorder %v355, 0
        %vm358 = vcmp.ge.s32.totalorder %v356, 0
        %vm359 = vmand %vm289, %vm357
        %vm360 = vmand %vm290, %vm358
        %vm361 = vcmp.lt.s32.totalorder %v355, 16
        %vm362 = vcmp.lt.s32.totalorder %v356, 16
        %vm363 = vmand %vm359, %vm361
        %vm364 = vmand %vm360, %vm362
        %v365 = vsel %vm363, 1, 0
        %v366 = vsel %vm364, 1, 0
        %vm367 = vcmp.eq.s32.totalorder %v365, 1
        %vm368 = vcmp.eq.s32.totalorder %v366, 1
        %v371 = vcombine.high %v353, %v353
        %372 = vrot.lane.b32.xlu0 %v353, 15
        %v373 = vpop.permute.xlu0 %372
        %374 = vrot.lane.b32.xlu0 %v371, 15
        %v375 = vpop.permute.xlu0 %374
        %376 = vrot.lane.b32.xlu0 %v354, 15
        %v377 = vpop.permute.xlu0 %376
        %vm378 = vcmask 121856
        %v379 = vsel %vm378, %v373, %v375
        %v380 = vsel %vm378, %v375, %v377
        %v383 = vsel %vm367, %v379, 0.0
        %v384 = vsel %vm368, %v380, 0.0
        %385 = vst [vmem:[#allocation3 + $0x10] sm:$0xf] %v383
        %386 = vst [vmem:[#allocation3 + $0x18] sm:$0xf] %v384
        %v387 = vld [vmem:[#allocation2] sm:$0xff]
        %v388 = vld [vmem:[#allocation2 + $0x8] sm:$0xf]
        %vm389 = vcmp.ge.s32.totalorder %v279, 0
        %vm390 = vcmp.ge.s32.totalorder %v280, 0
        %vm391 = vmand %vm389, %vm287
        %vm392 = vmand %vm390, %vm288
        %vm393 = vmand %vm391, %vm293
        %vm394 = vmand %vm392, %vm294
        %vm395 = vmand %vm393, %vm297
        %vm396 = vmand %vm394, %vm298
        %v397 = vsel %vm395, 1, 0
        %v398 = vsel %vm396, 1, 0
        %vm399 = vcmp.eq.s32.totalorder %v397, 1
        %vm400 = vcmp.eq.s32.totalorder %v398, 1
        %v403 = vcombine.high %v387, %v387
        %404 = vrot.lane.b32.xlu0 %v387, 1
        %v405 = vpop.permute.xlu0 %404
        %406 = vrot.lane.b32.xlu0 %v403, 1
        %v407 = vpop.permute.xlu0 %406
        %408 = vrot.lane.b32.xlu0 %v388, 1
        %v409 = vpop.permute.xlu0 %408
        %vm410 = vcmask 7168
        %v411 = vsel %vm410, %v405, %v407
        %v412 = vsel %vm410, %v407, %v409
        %v415 = vsel %vm399, %v411, 0.0
        %v416 = vsel %vm400, %v412, 0.0
        %v419 = vrot.slane %v415, 4
        %v420 = vrot.slane %v416, 4
        %423 = vst [vmem:[#allocation3 + $0x10] sm:$0xf0] %v419
        %424 = vst [vmem:[#allocation3 + $0x18] sm:$0xf0] %v420
        %v425 = vld [vmem:[#allocation2 + $0x4] sm:$0xff]
        %v426 = vsel %vm391, 1, 0
        %v427 = vsel %vm392, 1, 0
        %vm428 = vcmp.eq.s32.totalorder %v426, 1
        %vm429 = vcmp.eq.s32.totalorder %v427, 1
        %v431 = vcombine.high %v425, %v425
        %v433 = vsel %vm428, %v425, 0.0
        %v434 = vsel %vm429, %v431, 0.0
        %435 = vst [vmem:[#allocation3 + $0x20] sm:$0xf] %v433
        %436 = vst [vmem:[#allocation3 + $0x28] sm:$0xf] %v434
        %v437 = vld [vmem:[#allocation2 + $0x4] sm:$0xff]
        %v438 = vld [vmem:[#allocation2 + $0xc] sm:$0xf]
        %vm439 = vmand %vm391, %vm357
        %vm440 = vmand %vm392, %vm358
        %vm441 = vmand %vm439, %vm361
        %vm442 = vmand %vm440, %vm362
        %v443 = vsel %vm441, 1, 0
        %v444 = vsel %vm442, 1, 0
        %vm445 = vcmp.eq.s32.totalorder %v443, 1
        %vm446 = vcmp.eq.s32.totalorder %v444, 1
        %v449 = vcombine.high %v437, %v437
        %450 = vrot.lane.b32.xlu0 %v437, 127
        %v451 = vpop.permute.xlu0 %450
        %452 = vrot.lane.b32.xlu0 %v449, 127
        %v453 = vpop.permute.xlu0 %452
        %454 = vrot.lane.b32.xlu0 %v438, 127
        %v455 = vpop.permute.xlu0 %454
        %vm456 = vcmask 1039360
        %v457 = vsel %vm456, %v451, %v453
        %v458 = vsel %vm456, %v453, %v455
        %v461 = vsel %vm445, %v457, 0.0
        %v462 = vsel %vm446, %v458, 0.0
        %v465 = vrot.slane %v461, 4
        %v466 = vrot.slane %v462, 4
        %469 = vst [vmem:[#allocation3 + $0x20] sm:$0xf0] %v465
        %470 = vst [vmem:[#allocation3 + $0x28] sm:$0xf0] %v466
        %v471 = vld [vmem:[#allocation2 + $0x4] sm:$0xff]
        %v472 = vld [vmem:[#allocation2 + $0xc] sm:$0xf]
        %vm473 = vcmp.lt.s32.totalorder %v279, 240
        %vm474 = vcmp.lt.s32.totalorder %v280, 240
        %vm475 = vmand %vm389, %vm473
        %vm476 = vmand %vm390, %vm474
        %vm477 = vmand %vm475, %vm293
        %vm478 = vmand %vm476, %vm294
        %vm479 = vmand %vm477, %vm297
        %vm480 = vmand %vm478, %vm298
        %v481 = vsel %vm479, 1, 0
        %v482 = vsel %vm480, 1, 0
        %vm483 = vcmp.eq.s32.totalorder %v481, 1
        %vm484 = vcmp.eq.s32.totalorder %v482, 1
        %v487 = vcombine.high %v471, %v471
        %488 = vrot.lane.b32.xlu0 %v471, 113
        %v489 = vpop.permute.xlu0 %488
        %490 = vrot.lane.b32.xlu0 %v487, 113
        %v491 = vpop.permute.xlu0 %490
        %492 = vrot.lane.b32.xlu0 %v472, 113
        %v493 = vpop.permute.xlu0 %492
        %vm494 = vcmask 924672
        %v495 = vsel %vm494, %v489, %v491
        %v496 = vsel %vm494, %v491, %v493
        %v499 = vsel %vm483, %v495, 0.0
        %v500 = vsel %vm484, %v496, 0.0
        %501 = vst [vmem:[#allocation3 + $0x30] sm:$0xf] %v499
        %502 = vst [vmem:[#allocation3 + $0x38] sm:$0xf] %v500
        %v503 = vld [vmem:[#allocation2 + $0x4] sm:$0xff]
        %v504 = vld [vmem:[#allocation2 + $0xc] sm:$0xf]
        %v505 = vsel %vm475, 1, 0
        %v506 = vsel %vm476, 1, 0
        %vm507 = vcmp.eq.s32.totalorder %v505, 1
        %vm508 = vcmp.eq.s32.totalorder %v506, 1
        %v511 = vcombine.high %v503, %v503
        %512 = vrot.lane.b32.xlu0 %v503, 112
        %v513 = vpop.permute.xlu0 %512
        %514 = vrot.lane.b32.xlu0 %v511, 112
        %v515 = vpop.permute.xlu0 %514
        %516 = vrot.lane.b32.xlu0 %v504, 112
        %v517 = vpop.permute.xlu0 %516
        %vm518 = vcmask 916480
        %v519 = vsel %vm518, %v513, %v515
        %v520 = vsel %vm518, %v515, %v517
        %v523 = vsel %vm507, %v519, 0.0
        %v524 = vsel %vm508, %v520, 0.0
        %v527 = vrot.slane %v523, 4
        %v528 = vrot.slane %v524, 4
        %531 = vst [vmem:[#allocation3 + $0x30] sm:$0xf0] %v527
        %532 = vst [vmem:[#allocation3 + $0x38] sm:$0xf0] %v528
        %v533 = vld [vmem:[#allocation2 + $0x4] sm:$0xff]
        %v534 = vld [vmem:[#allocation2 + $0xc] sm:$0xf]
        %vm535 = vmand %vm475, %vm357
        %vm536 = vmand %vm476, %vm358
        %vm537 = vmand %vm535, %vm361
        %vm538 = vmand %vm536, %vm362
        %v539 = vsel %vm537, 1, 0
        %v540 = vsel %vm538, 1, 0
        %vm541 = vcmp.eq.s32.totalorder %v539, 1
        %vm542 = vcmp.eq.s32.totalorder %v540, 1
        %v545 = vcombine.high %v533, %v533
        %546 = vrot.lane.b32.xlu0 %v533, 111
        %v547 = vpop.permute.xlu0 %546
        %548 = vrot.lane.b32.xlu0 %v545, 111
        %v549 = vpop.permute.xlu0 %548
        %550 = vrot.lane.b32.xlu0 %v534, 111
        %v551 = vpop.permute.xlu0 %550
        %vm552 = vcmask 908288
        %v553 = vsel %vm552, %v547, %v549
        %v554 = vsel %vm552, %v549, %v551
        %v557 = vsel %vm541, %v553, 0.0
        %v558 = vsel %vm542, %v554, 0.0
        %559 = vst [vmem:[#allocation3 + $0x40] sm:$0xf] %v557
        %560 = vst [vmem:[#allocation3 + $0x48] sm:$0xf] %v558
        %v561 = vld [vmem:[%s1] sm:$0xff]
        %v562 = vld [vmem:[#allocation3] sm:$0xff]
        %v563 = vld [vmem:[#allocation3 + $0x8] sm:$0xff]
        %v564 = vld [vmem:[#allocation3 + $0x10] sm:$0xff]
        %v565 = vld [vmem:[#allocation3 + $0x18] sm:$0xff]
        %v566 = vld [vmem:[#allocation3 + $0x20] sm:$0xff]
        %v567 = vld [vmem:[#allocation3 + $0x28] sm:$0xff]
        %v568 = vld [vmem:[#allocation3 + $0x30] sm:$0xff]
        %v569 = vld [vmem:[#allocation3 + $0x38] sm:$0xff]
        %v570 = vld [vmem:[#allocation3 + $0x40] sm:$0xf]
        %v571 = vld [vmem:[#allocation3 + $0x48] sm:$0xf]
        %v572 = vld [vmem:[%s2] sm:$0xff]
        %574 = vset.pattern.permute.xlu0 0
        %575 = vperm.xlu0 %574, %v572
        %v576 = vpop.permute.xlu0 %575
        %vm578 = vcmask 293888
        %v580 = vsel %vm578, %v561, 0
        %vm582 = vcmask 1043456
        %v584 = vsel %vm582, %v570, 0
        %v587 = vsel %vm582, %v571, 0
        %589 = vmatprep.subr.mxu0 0.0
        %590 = vmatpush1.msra.mxu0 0.0
        %591 = vmatprep.subr.mxu0 0.0
        %592 = vmatpush1.msra.mxu0 0.0
        %593 = vmatprep.subr.mxu0 0.0
        %594 = vmatpush1.msra.mxu0 0.0
        %595 = vmatprep.subr.mxu0 0.0
        %596 = vmatpush1.msra.mxu0 0.0
        %597 = vmatprep.subr.mxu0 0.0
        %598 = vmatpush1.msra.mxu0 0.0
        %599 = vmatprep.subr.mxu0 0.0
        %600 = vmatpush1.msra.mxu0 0.0
        %601 = vmatprep.subr.mxu0 0.0
        %602 = vmatpush1.msra.mxu0 0.0
        %603 = vmatprep.subr.mxu0 0.0
        %604 = vmatpush1.msra.mxu0 0.0
        %605 = vmatprep.subr.mxu0 0.0
        %606 = vmatpush1.msra.mxu0 0.0
        %607 = vmatprep.subr.mxu0 0.0
        %608 = vmatpush1.msra.mxu0 0.0
        %609 = vmatprep.subr.mxu0 0.0
        %610 = vmatpush1.msra.mxu0 0.0
        %611 = vmatprep.subr.mxu0 %v587
        %612 = vmatpush1.msra.mxu0 %v584
        %613 = vmatprep.subr.mxu0 %v569
        %614 = vmatpush1.msra.mxu0 %v568
        %615 = vmatprep.subr.mxu0 %v567
        %616 = vmatpush1.msra.mxu0 %v566
        %617 = vmatprep.subr.mxu0 %v565
        %618 = vmatpush1.msra.mxu0 %v564
        %619 = vmatprep.subr.mxu0 %v563
        %620 = vmatpush1.msra.mxu0 %v562
        %621 = vmatprep.subr.mxu0 0.0
        %622 = vmatpush2.msra.mxu0 0.0
        %623 = vmatprep.subr.mxu0 0.0
        %624 = vmatpush2.msra.mxu0 0.0
        %625 = vmatprep.subr.mxu0 0.0
        %626 = vmatpush2.msra.mxu0 0.0
        %627 = vmatprep.subr.mxu0 0.0
        %628 = vmatpush2.msra.mxu0 0.0
        %629 = vmatprep.subr.mxu0 0.0
        %630 = vmatpush2.msra.mxu0 0.0
        %631 = vmatprep.subr.mxu0 0.0
        %632 = vmatpush2.msra.mxu0 0.0
        %633 = vmatprep.subr.mxu0 0.0
        %634 = vmatpush2.msra.mxu0 0.0
        %635 = vmatprep.subr.mxu0 0.0
        %636 = vmatpush2.msra.mxu0 0.0
        %637 = vmatprep.subr.mxu0 0.0
        %638 = vmatpush2.msra.mxu0 0.0
        %639 = vmatprep.subr.mxu0 0.0
        %640 = vmatpush2.msra.mxu0 0.0
        %641 = vmatprep.subr.mxu0 0.0
        %642 = vmatpush2.msra.mxu0 0.0
        %643 = vmatprep.subr.mxu0 0.0
        %644 = vmatpush2.msra.mxu0 0.0
        %645 = vmatprep.subr.mxu0 0.0
        %646 = vmatpush2.msra.mxu0 0.0
        %647 = vmatprep.subr.mxu0 0.0
        %648 = vmatpush2.msra.mxu0 0.0
        %649 = vmatprep.subr.mxu0 0.0
        %650 = vmatpush2.msra.mxu0 0.0
        %651 = vmatprep.subr.mxu0 0.0
        %652 = vmatpush2.msra.mxu0 0.0
        %653 = vmatprep.mubr.f32.mxu0 0.0
        %654 = vmatmul.mubr.f32.gmra.mxu0 %v580
        %v655 = vpop.f32.mrf.mxu0
        %v656 = vadd.f32 %v576, %v655
        %v657 = vpop.f32.mrf.mxu0
        %v658 = vadd.f32 %v576, %v657
        %659 = vdwg.mxu0
        %s660 = smul.u32 %s21, 2
        %s661 = smul.addr %s660, 8
        %s662 = scalar_lea.vmem [#allocation4], %s661
        %663 = vst [vmem:[%s662] sm:$0xff] %v656
        %664 = vst [vmem:[%s662 + $0x8] sm:$0xff] %v658
        %v665 = vld [vmem:[#allocation5] sm:$0xff]
        %v666 = vadd.f32 %v656, %v658
        %667 = vadd.xlane.f32.xlu0 %v666
        %v668 = vpop.xlane.xlu0 %667
        %v669 = vadd.f32 %v665, %v668
        %670 = vst.msk [vmem:[#allocation5] sm:$0xff] %vm410, %v669
        %v671 = vld [vmem:[#allocation6] sm:$0xff]
        %v672 = vmul.f32 %v656, %v656
        %v673 = vmul.f32 %v658, %v658
        %v674 = vadd.f32 %v672, %v673
        %675 = vadd.xlane.f32.xlu0 %v674
        %v676 = vpop.xlane.xlu0 %675
        %v677 = vadd.f32 %v671, %v676
        %678 = vst.msk [vmem:[#allocation6] sm:$0xff] %vm410, %v677
      $region44: #{basic_layer_forward.1} parent=39 // pred_fallthru
        _
      %p679 = scmp.eq.s32.totalorder %s20, 1
      // Predicated region
      $region49: #{basic_layer_forward.1} parent=39 // pred_check
        %p680 = pneg %p679
      $region50: #{basic_layer_forward.1} parent=39 // pred_check_branch
        %682 = sbr.rel (%p680) target = $region52
      $region51: #{basic_layer_forward.1} parent=39 // pred_region
        %p683 = scmp.eq.s32.totalorder %s21, 0
        // Predicated region
        $region53: #{basic_layer_forward.1} parent=51 // pred_check
          %p684 = pneg %p683
        $region54: #{basic_layer_forward.1} parent=51 // pred_check_branch
          %686 = sbr.rel (%p684) target = $region56
        $region55: #{basic_layer_forward.1} parent=51 // pred_region
          %v687 = vld [vmem:[#allocation5] sm:$0xff]
          %v688 = vrcp.pop 512.0
          %v689 = vmul.f32 %v687, %v688
          %v690 = vld [vmem:[#allocation6] sm:$0xff]
          %v691 = vmul.f32 %v690, %v688
          %v692 = vmul.f32 %v689, %v689
          %v693 = vsub.f32 %v691, %v692
          %v694 = vmax.f32 %v693, 0.0
          %v695 = vld [vmem:[%s3] sm:$0xff]
          %v696 = vadd.f32 %v694, 1e-05
          %v697 = vrsqrt.pop %v696
          %v698 = vmul.f32 %v695, %v697
          %vm699 = vcmask 7168
          %700 = vst.msk [vmem:[#allocation7] sm:$0xff] %vm699, %v698
          %v701 = vld [vmem:[%s4] sm:$0xff]
          %v702 = vmul.f32 %v689, %v698
          %v703 = vsub.f32 %v701, %v702
          %704 = vst.msk [vmem:[#allocation8] sm:$0xff] %vm699, %v703
        $region56: #{basic_layer_forward.1} parent=51 // pred_fallthru
          _
        %s705 = smul.u32 %s21, 2
        %s706 = smul.addr %s705, 8
        %s707 = scalar_lea.vmem [#allocation4], %s706
        %v708 = vld [vmem:[%s707] sm:$0xff]
        %v709 = vld [vmem:[%s707 + $0x8] sm:$0xff]
        %v710 = vld [vmem:[#allocation7] sm:$0xff]
        %712 = vset.pattern.permute.xlu0 0
        %713 = vperm.xlu0 %712, %v710
        %v714 = vpop.permute.xlu0 %713
        %v716 = vmul.f32 %v708, %v714
        %v717 = vmul.f32 %v709, %v714
        %v718 = vld [vmem:[#allocation8] sm:$0xff]
        %720 = vset.pattern.permute.xlu0 0
        %721 = vperm.xlu0 %720, %v718
        %v722 = vpop.permute.xlu0 %721
        %v724 = vadd.f32 %v716, %v722
        %v725 = vadd.f32 %v717, %v722
        %v726 = vmax.f32 %v724, 0.0
        %v727 = vmax.f32 %v725, 0.0
        %728 = vst [vmem:[%s261] sm:$0xff] %v726
        %729 = vst [vmem:[%s261 + $0x8] sm:$0xff] %v727
      $region52: #{basic_layer_forward.1} parent=39 // pred_fallthru
        _
      %s730 = smul.u32 %s20, %s21
      %p731 = scmp.lt.s32.totalorder %s730, 1
      %s732 = scalar_select %p731, %s730, 1
      %s733 = smul.addr %s732, 2
      %s734 = smul.addr %s733, 8
      %s735 = scalar_lea.vmem %s5, %s734
      // Predicated region
      $region57: #{basic_layer_forward.1} parent=39 // pred_check
        %p736 = pneg %p164
      $region58: #{basic_layer_forward.1} parent=39 // pred_check_branch
        %738 = sbr.rel (%p736) target = $region60
      $region59: #{basic_layer_forward.1} parent=39 // pred_region
        %s739 = smul.u32 %s20, %s21
      $region60: #{basic_layer_forward.1} parent=39 // pred_fallthru
        _
    $region40: #{basic_layer_forward.1} parent=5 // pred_fallthru
      _
    %p740 = scmp.le.s32.totalorder 2, %s11
    // Predicated region
    $region61: #{basic_layer_forward.1} parent=5 // pred_check
      %p741 = pneg %p740
    $region62: #{basic_layer_forward.1} parent=5 // pred_check_branch
      %743 = sbr.rel (%p741) target = $region64
    $region63: #{basic_layer_forward.1} parent=5 // pred_region
      %s744 = ssub.s32 %s11, 2
      // Predicated region
      $region65: #{basic_layer_forward.1} parent=63 // pred_check
        %p745 = pneg %p170
      $region66: #{basic_layer_forward.1} parent=63 // pred_check_branch
        %747 = sbr.rel (%p745) target = $region68
      $region67: #{basic_layer_forward.1} parent=63 // pred_region
        %s748 = smul.u32 %s22, %s23
        %p749 = scmp.lt.s32.totalorder %s748, 1
        %s750 = scalar_select %p749, %s748, 1
        %s751 = smul.addr %s750, 2
        %s752 = smul.addr %s751, 8
        %s753 = scalar_lea.vmem %s5, %s752
      $region68: #{basic_layer_forward.1} parent=63 // pred_fallthru
        _
    $region64: #{basic_layer_forward.1} parent=5 // pred_fallthru
      _
  $region6: #{basic_layer_forward.1} parent=0 // loop_footer
    %s15 = sadd.s32 1, %s11
  $region7: #{basic_layer_forward.1} parent=0 // loop_footer_branch
    %10 = sbr.rel target = $region3
  $region8: #{basic_layer_forward.1} parent=0 // loop_exit
    _

</llo_original>
